<compile_context>
chip_gen: v5e
topology: v5e:2x2
jax: 0.10.0
libtpu: 0.0.40
codegen_flags: <defaults>
</compile_context>

<pallas_src>
import jax
import jax.numpy as jnp
from jax.experimental import pallas as pl
from jax.experimental.pallas import tpu as pltpu


def _round_up(x, m):
    return ((x + m - 1) // m) * m


def _choose_tb(b, itemsize):
    """Rows per output block: fill sublanes (8 f32 / 16 sub-32-bit), grow with B."""
    base = 8 if itemsize >= 4 else 16
    tb = base
    while tb * 2 <= min(b, 64):   # cap unroll depth at 64
        tb *= 2
    return tb


def _gather_block_kernel(labels_ref, table_ref, out_ref):
    # labels_ref: [B_pad] int32 in SMEM (scalar prefetch).
    # table_ref:  [C_pad, D_pad] — whole table, VMEM-resident (constant index_map).
    # out_ref:    [TB, D_pad] — output rows for this batch block.
    i = pl.program_id(0)
    tb = out_ref.shape[0]
    base = i * tb
    # Statically unrolled per-row copy loop: dynamic-row load from the resident
    # table, static-row store into the lane-dense output block.
    for j in range(tb):
        row = labels_ref[base + j]
        out_ref[pl.ds(j, 1), :] = table_ref[pl.ds(row, 1), :]


def label_embedder_forward(condition, embedding_table, *, force_pallas=False):
    """condition: int [B]; embedding_table: float [C, D] -> [B, D]."""
    b = condition.shape[0]
    c, d = embedding_table.shape
    itemsize = jnp.dtype(embedding_table.dtype).itemsize

    # Clamp so out-of-range / negative labels cannot cause an OOB access.
    # (torch.nn.Embedding raises instead — documented divergence.)
    labels = jnp.clip(condition.astype(jnp.int32), 0, c - 1)

    # Tiny problems: kernel launch + grid overhead dwarfs the copy; use XLA.
    if not force_pallas and b * d * itemsize < (64 << 10):
        return jnp.take(embedding_table, labels, axis=0)

    tb = _choose_tb(b, itemsize)
    d_pad = _round_up(d, 128)          # lane-dense stores
    c_pad = _round_up(c, 8)            # sublane-aligned resident table
    b_pad = _round_up(b, tb)

    table_bytes = c_pad * d_pad * itemsize
    out_blk_bytes = tb * d_pad * itemsize
    # Budget: table may be double-buffered by the pipeline + a few output bufs.
    required = 2 * table_bytes + 3 * out_blk_bytes + (2 << 20)
    if required > (48 << 20):
        # TODO(synk): column-tile the table (grid over D, block (C, d_tile)) for
        # tables that exceed the v7x 64 MiB VMEM budget instead of falling back.
        return jnp.take(embedding_table, labels, axis=0)

    table_p = jnp.pad(embedding_table, ((0, c_pad - c), (0, d_pad - d)))
    labels_p = jnp.pad(labels, (0, b_pad - b))

    out = pl.pallas_call(
        _gather_block_kernel,
        out_shape=jax.ShapeDtypeStruct((b_pad, d_pad), embedding_table.dtype),
        grid_spec=pltpu.PrefetchScalarGridSpec(
            num_scalar_prefetch=1,                 # labels -> SMEM
            grid=(b_pad // tb,),                   # one batch block per step
            in_specs=[
                # Constant index_map -> whole table fetched once, VMEM-resident.
                pl.BlockSpec((c_pad, d_pad), lambda i, labels: (0, 0)),
            ],
            out_specs=pl.BlockSpec((tb, d_pad), lambda i, labels: (i, 0)),
        ),
        compiler_params=pltpu.CompilerParams(
            # Independent output blocks: megacore-shard the batch axis on v7x.
            dimension_semantics=("parallel",),
            vmem_limit_bytes=int(min(max(required, 16 << 20), 56 << 20)),
        ),
    )(labels_p, table_p)

    return out[:b, :d]


if __name__ == "__main__":
    emb_dim = 32
    num_classes = 2
    batch = 8

    key = jax.random.PRNGKey(0)
    k_table, k_cond = jax.random.split(key)

    # Deterministic parameter init (mirrors nn.Embedding's weight ~ N(0, 1)).
    embedding_table = jax.random.normal(k_table, (num_classes, emb_dim),
                                        dtype=jnp.float32)
    condition = jax.random.randint(k_cond, (batch,), 0, num_classes,
                                   dtype=jnp.int32)

    ref = jnp.take(embedding_table, condition, axis=0)

    # Pallas path (forced: the shipped shapes are below the auto cutoff).
    out = label_embedder_forward(condition, embedding_table, force_pallas=True)
    out = jax.block_until_ready(out)
    assert out.shape == (batch, emb_dim)
    assert jnp.array_equal(out, ref), "mismatch vs reference gather (pallas)"

    # Auto-dispatch path (tiny-size cutoff -> jnp.take) for wrapper coverage.
    out_small = jax.block_until_ready(
        label_embedder_forward(condition, embedding_table))
    assert jnp.array_equal(out_small, ref), "mismatch vs reference gather (xla)"

    print("KERNEL_OK")
</pallas_src>

<mosaic_0001>
module attributes {stable_mosaic.version = 11 : i64} {
  func.func @_gather_block_kernel(%arg0: i32, %arg1: memref<8xi32, #tpu.memory_space<smem>>, %arg2: memref<8x128xf32, #tpu.memory_space<vmem>>, %arg3: memref<8x128xf32, #tpu.memory_space<vmem>>) attributes {dimension_semantics = [#tpu.dimension_semantics<parallel>], iteration_bounds = array<i64: 1>, scalar_prefetch = 1 : i64, scratch_operands = 0 : i64, tpu.core_type = #tpu.core_type<tc>, window_params = [{pipeline_mode = #tpu.pipeline_mode<synchronous>, transform_indices = @transform_0, window_bounds = array<i64: 8, 128>}, {transform_indices = @transform_1, window_bounds = array<i64: 8, 128>}]} {
    %c8_i32 = arith.constant 8 : i32
    %0 = arith.muli %arg0, %c8_i32 : i32
    %c0_i32 = arith.constant 0 : i32
    %1 = arith.addi %0, %c0_i32 : i32
    %2 = arith.index_cast %1 : i32 to index
    %3 = memref.load %arg1[%2] : memref<8xi32, #tpu.memory_space<smem>>
    %4 = arith.index_cast %3 : i32 to index
    %c0 = arith.constant 0 : index
    %5 = vector.load %arg2[%4, %c0] : memref<8x128xf32, #tpu.memory_space<vmem>>, vector<1x128xf32>
    %c0_0 = arith.constant 0 : index
    %c0_1 = arith.constant 0 : index
    %6 = vector.load %arg3[%c0_0, %c0_1] : memref<8x128xf32, #tpu.memory_space<vmem>>, vector<1x128xf32>
    tpu.vector_store %arg3[%c0_0, %c0_1], %5 {strides = array<i32>} : memref<8x128xf32, #tpu.memory_space<vmem>>, vector<1x128xf32>,
    %c1_i32 = arith.constant 1 : i32
    %7 = arith.addi %0, %c1_i32 : i32
    %8 = arith.index_cast %7 : i32 to index
    %9 = memref.load %arg1[%8] : memref<8xi32, #tpu.memory_space<smem>>
    %10 = arith.index_cast %9 : i32 to index
    %c0_2 = arith.constant 0 : index
    %11 = vector.load %arg2[%10, %c0_2] : memref<8x128xf32, #tpu.memory_space<vmem>>, vector<1x128xf32>
    %c1 = arith.constant 1 : index
    %c0_3 = arith.constant 0 : index
    %12 = vector.load %arg3[%c1, %c0_3] : memref<8x128xf32, #tpu.memory_space<vmem>>, vector<1x128xf32>
    tpu.vector_store %arg3[%c1, %c0_3], %11 {strides = array<i32>} : memref<8x128xf32, #tpu.memory_space<vmem>>, vector<1x128xf32>,
    %c2_i32 = arith.constant 2 : i32
    %13 = arith.addi %0, %c2_i32 : i32
    %14 = arith.index_cast %13 : i32 to index
    %15 = memref.load %arg1[%14] : memref<8xi32, #tpu.memory_space<smem>>
    %16 = arith.index_cast %15 : i32 to index
    %c0_4 = arith.constant 0 : index
    %17 = vector.load %arg2[%16, %c0_4] : memref<8x128xf32, #tpu.memory_space<vmem>>, vector<1x128xf32>
    %c2 = arith.constant 2 : index
    %c0_5 = arith.constant 0 : index
    %18 = vector.load %arg3[%c2, %c0_5] : memref<8x128xf32, #tpu.memory_space<vmem>>, vector<1x128xf32>
    tpu.vector_store %arg3[%c2, %c0_5], %17 {strides = array<i32>} : memref<8x128xf32, #tpu.memory_space<vmem>>, vector<1x128xf32>,
    %c3_i32 = arith.constant 3 : i32
    %19 = arith.addi %0, %c3_i32 : i32
    %20 = arith.index_cast %19 : i32 to index
    %21 = memref.load %arg1[%20] : memref<8xi32, #tpu.memory_space<smem>>
    %22 = arith.index_cast %21 : i32 to index
    %c0_6 = arith.constant 0 : index
    %23 = vector.load %arg2[%22, %c0_6] : memref<8x128xf32, #tpu.memory_space<vmem>>, vector<1x128xf32>
    %c3 = arith.constant 3 : index
    %c0_7 = arith.constant 0 : index
    %24 = vector.load %arg3[%c3, %c0_7] : memref<8x128xf32, #tpu.memory_space<vmem>>, vector<1x128xf32>
    tpu.vector_store %arg3[%c3, %c0_7], %23 {strides = array<i32>} : memref<8x128xf32, #tpu.memory_space<vmem>>, vector<1x128xf32>,
    %c4_i32 = arith.constant 4 : i32
    %25 = arith.addi %0, %c4_i32 : i32
    %26 = arith.index_cast %25 : i32 to index
    %27 = memref.load %arg1[%26] : memref<8xi32, #tpu.memory_space<smem>>
    %28 = arith.index_cast %27 : i32 to index
    %c0_8 = arith.constant 0 : index
    %29 = vector.load %arg2[%28, %c0_8] : memref<8x128xf32, #tpu.memory_space<vmem>>, vector<1x128xf32>
    %c4 = arith.constant 4 : index
    %c0_9 = arith.constant 0 : index
    %30 = vector.load %arg3[%c4, %c0_9] : memref<8x128xf32, #tpu.memory_space<vmem>>, vector<1x128xf32>
    tpu.vector_store %arg3[%c4, %c0_9], %29 {strides = array<i32>} : memref<8x128xf32, #tpu.memory_space<vmem>>, vector<1x128xf32>,
    %c5_i32 = arith.constant 5 : i32
    %31 = arith.addi %0, %c5_i32 : i32
    %32 = arith.index_cast %31 : i32 to index
    %33 = memref.load %arg1[%32] : memref<8xi32, #tpu.memory_space<smem>>
    %34 = arith.index_cast %33 : i32 to index
    %c0_10 = arith.constant 0 : index
    %35 = vector.load %arg2[%34, %c0_10] : memref<8x128xf32, #tpu.memory_space<vmem>>, vector<1x128xf32>
    %c5 = arith.constant 5 : index
    %c0_11 = arith.constant 0 : index
    %36 = vector.load %arg3[%c5, %c0_11] : memref<8x128xf32, #tpu.memory_space<vmem>>, vector<1x128xf32>
    tpu.vector_store %arg3[%c5, %c0_11], %35 {strides = array<i32>} : memref<8x128xf32, #tpu.memory_space<vmem>>, vector<1x128xf32>,
    %c6_i32 = arith.constant 6 : i32
    %37 = arith.addi %0, %c6_i32 : i32
    %38 = arith.index_cast %37 : i32 to index
    %39 = memref.load %arg1[%38] : memref<8xi32, #tpu.memory_space<smem>>
    %40 = arith.index_cast %39 : i32 to index
    %c0_12 = arith.constant 0 : index
    %41 = vector.load %arg2[%40, %c0_12] : memref<8x128xf32, #tpu.memory_space<vmem>>, vector<1x128xf32>
    %c6 = arith.constant 6 : index
    %c0_13 = arith.constant 0 : index
    %42 = vector.load %arg3[%c6, %c0_13] : memref<8x128xf32, #tpu.memory_space<vmem>>, vector<1x128xf32>
    tpu.vector_store %arg3[%c6, %c0_13], %41 {strides = array<i32>} : memref<8x128xf32, #tpu.memory_space<vmem>>, vector<1x128xf32>,
    %c7_i32 = arith.constant 7 : i32
    %43 = arith.addi %0, %c7_i32 : i32
    %44 = arith.index_cast %43 : i32 to index
    %45 = memref.load %arg1[%44] : memref<8xi32, #tpu.memory_space<smem>>
    %46 = arith.index_cast %45 : i32 to index
    %c0_14 = arith.constant 0 : index
    %47 = vector.load %arg2[%46, %c0_14] : memref<8x128xf32, #tpu.memory_space<vmem>>, vector<1x128xf32>
    %c7 = arith.constant 7 : index
    %c0_15 = arith.constant 0 : index
    %48 = vector.load %arg3[%c7, %c0_15] : memref<8x128xf32, #tpu.memory_space<vmem>>, vector<1x128xf32>
    tpu.vector_store %arg3[%c7, %c0_15], %47 {strides = array<i32>} : memref<8x128xf32, #tpu.memory_space<vmem>>, vector<1x128xf32>,
    return
  }
  func.func @transform_0(%arg0: i32, %arg1: memref<8xi32, #tpu.memory_space<smem>>) -> (i32, i32) {
    %c0_i32 = arith.constant 0 : i32
    %c0_i32_0 = arith.constant 0 : i32
    %c0_i32_1 = arith.constant 0 : i32
    return %c0_i32, %c0_i32_0 : i32, i32
  }
  func.func @transform_1(%arg0: i32, %arg1: memref<8xi32, #tpu.memory_space<smem>>) -> (i32, i32) {
    %c0_i32 = arith.constant 0 : i32
    %c0_i32_0 = arith.constant 0 : i32
    return %arg0, %c0_i32 : i32, i32
  }
}

</mosaic_0001>

<llo_original>
// kernel: tpu_custom_call.1
$region0: #{tpu_custom_call.1}
  #allocation0 [shape = 'u32[]', space=smem, size = 0x4, offset = 0x4, fixed_abs, tag = 'smem constant byte address 0x4 - core index']
  #allocation1 [shape = 'u32[72,128]{1,0:T(1,128)}', space=vmem, size = 0x9000, scoped, tag = 'internal scratch']
  #allocation2 [shape = 's32[1]{0}', space=sflag, size = 0x4, scoped, tag = 'scoped memory for tpu_custom_call.1']
  #allocation3 [shape = 'u8[512]{0}', space=smem, size = 0x200, scoped, tag = 'prefetched SMEM operand 0']
  %s0 = inlined_call_operand.hbm [shape: s32[8], index: 0, kind: input, shape index: {}]
  %s1 = inlined_call_operand.hbm [shape: f32[8,128], index: 1, kind: input, shape index: {}]
  %s2 = inlined_call_operand.hbm [shape: f32[8,128], index: 2, kind: output, shape index: {}]
  %s3 = sld [smem:[#allocation0]]
  $region18: #{tpu_custom_call.1} parent=0
    _
  %s5 = ssub.s32 1, %s3
  %s6 = scalar_select 0, %s5, %s3
  %s8 = sshll.u32 %s0, 4
  %s9 = int_to_ptr.hbm [resolvable:$true] %s8
  %11 = dma.hbm_to_smem %s9, 16, [#allocation3], [#allocation2]
  %13 = dma.done [#allocation2], 16
  %14 = sfence
  $region1: #{tpu_custom_call.1} parent=0
    #allocation4 [shape = 'u8[4096]{0}', space=vmem, size = 0x1000, scoped, tag = 'input window, operand 1, single buffered']
    #allocation5 [shape = 's32[1]{0}', space=sflag, size = 0x4, scoped, tag = 'scoped memory for tpu_custom_call.1']
    #allocation6 [shape = 's32[1]{0}', space=sflag, size = 0x4, scoped, tag = 'scoped memory for tpu_custom_call.1']
    #allocation7 [shape = 'u8[4096]{0}', space=vmem, size = 0x1000, scoped, tag = 'output window, operand 0, single buffered']
    %15 = vsyncpa [#allocation5], 0
    %16 = vsyncpa [#allocation6], 0
    // Predicated region
    $region2: #{tpu_custom_call.1} parent=1 // pred_check
      _
    $region3: #{tpu_custom_call.1} parent=1 // pred_check_branch
      %18 = sbr.rel (0) target = $region5
    $region4: #{tpu_custom_call.1} parent=1 // pred_region
      %20 = vsyncadd [#allocation5], 0
      %s22 = sshll.u32 %s1, 4
      %s23 = int_to_ptr.hbm [resolvable:$true] %s22
      %s24 = sshll.u32 [#allocation4], 4
      %s25 = int_to_ptr.vmem [resolvable:$true] %s24
      %27 = dma.hbm_to_vmem [thread:$0]  %s23, 128, %s25, [#allocation5]
    $region5: #{tpu_custom_call.1} parent=1 // pred_fallthru
      _
    // Predicated region
    $region6: #{tpu_custom_call.1} parent=1 // pred_check
      _
    $region7: #{tpu_custom_call.1} parent=1 // pred_check_branch
      %29 = sbr.rel (0) target = $region9
    $region8: #{tpu_custom_call.1} parent=1 // pred_region
      %31 = dma.done [#allocation5], 128
    $region9: #{tpu_custom_call.1} parent=1 // pred_fallthru
      _
    %s32 = smul.u32 0, 8
    %s33 = sld [smem:[#allocation3 + %s32]]
    %s34 = scalar_lea.vmem [#allocation4], %s33
    %v35 = vld [vmem:[%s34] sm:$0x1]
    %36 = vst [vmem:[#allocation7] sm:$0x1] %v35
    %s37 = sadd.s32 %s32, 1
    %s38 = sld [smem:[#allocation3 + %s37]]
    %s39 = scalar_lea.vmem [#allocation4], %s38
    %v40 = vld [vmem:[%s39] sm:$0x1]
    %41 = vst [vmem:[#allocation7 + $0x1] sm:$0x1] %v40
    %s42 = sadd.s32 %s32, 2
    %s43 = sld [smem:[#allocation3 + %s42]]
    %s44 = scalar_lea.vmem [#allocation4], %s43
    %v45 = vld [vmem:[%s44] sm:$0x1]
    %46 = vst [vmem:[#allocation7 + $0x2] sm:$0x1] %v45
    %s47 = sadd.s32 %s32, 3
    %s48 = sld [smem:[#allocation3 + %s47]]
    %s49 = scalar_lea.vmem [#allocation4], %s48
    %v50 = vld [vmem:[%s49] sm:$0x1]
    %51 = vst [vmem:[#allocation7 + $0x3] sm:$0x1] %v50
    %s52 = sadd.s32 %s32, 4
    %s53 = sld [smem:[#allocation3 + %s52]]
    %s54 = scalar_lea.vmem [#allocation4], %s53
    %v55 = vld [vmem:[%s54] sm:$0x1]
    %56 = vst [vmem:[#allocation7 + $0x4] sm:$0x1] %v55
    %s57 = sadd.s32 %s32, 5
    %s58 = sld [smem:[#allocation3 + %s57]]
    %s59 = scalar_lea.vmem [#allocation4], %s58
    %v60 = vld [vmem:[%s59] sm:$0x1]
    %61 = vst [vmem:[#allocation7 + $0x5] sm:$0x1] %v60
    %s62 = sadd.s32 %s32, 6
    %s63 = sld [smem:[#allocation3 + %s62]]
    %s64 = scalar_lea.vmem [#allocation4], %s63
    %v65 = vld [vmem:[%s64] sm:$0x1]
    %66 = vst [vmem:[#allocation7 + $0x6] sm:$0x1] %v65
    %s67 = sadd.s32 %s32, 7
    %s68 = sld [smem:[#allocation3 + %s67]]
    %s69 = scalar_lea.vmem [#allocation4], %s68
    %v70 = vld [vmem:[%s69] sm:$0x1]
    %71 = vst [vmem:[#allocation7 + $0x7] sm:$0x1] %v70
    // Predicated region
    $region10: #{tpu_custom_call.1} parent=1 // pred_check
      _
    $region11: #{tpu_custom_call.1} parent=1 // pred_check_branch
      %73 = sbr.rel (0) target = $region13
    $region12: #{tpu_custom_call.1} parent=1 // pred_region
      %75 = vsyncadd [#allocation6], 0
      %s77 = sshll.u32 [#allocation7], 4
      %s78 = int_to_ptr.vmem [resolvable:$true] %s77
      %s79 = sshll.u32 %s2, 4
      %s80 = int_to_ptr.hbm [resolvable:$true] %s79
      %82 = dma.vmem_to_hbm [thread:$0]  %s78, 128, %s80, [#allocation6]
    $region13: #{tpu_custom_call.1} parent=1 // pred_fallthru
      _
    // Predicated region
    $region14: #{tpu_custom_call.1} parent=1 // pred_check
      _
    $region15: #{tpu_custom_call.1} parent=1 // pred_check_branch
      %84 = sbr.rel (0) target = $region17
    $region16: #{tpu_custom_call.1} parent=1 // pred_region
      %86 = dma.done [#allocation6], 128
    $region17: #{tpu_custom_call.1} parent=1 // pred_fallthru
      _
    %87 = vsyncpa [#allocation5], 1
    %88 = vsyncpa [#allocation6], 1

</llo_original>
